<compile_context>
chip_gen: v7x
topology: tpu7x:2x2x1
jax: 0.10.0
libtpu: 0.0.40
codegen_flags: <defaults>
</compile_context>

<pallas_src>
import functools

import jax
import jax.numpy as jnp
from jax.experimental import pallas as pl
from jax.experimental.pallas import tpu as pltpu


def _round_up(x, m):
    return ((x + m - 1) // m) * m


def _pad_axis(arr, axis, multiple):
    size = arr.shape[axis]
    pad = (-size) % multiple
    if pad == 0:
        return arr
    widths = [(0, 0)] * arr.ndim
    widths[axis] = (0, pad)
    return jnp.pad(arr, widths)


def _make_kernel(has_bias, split_f32):
    """x (tm, tk) bf16/f32, w (tk, tn) int8, scales/bias (1, tn) f32."""

    def compute(x_ref, w_ref, s_ref, b_ref, o_ref, acc_ref):
        k = pl.program_id(2)

        @pl.when(k == 0)
        def _():
            acc_ref[...] = jnp.zeros_like(acc_ref)

        # int8 -> bf16 per tile (exact for |w| <= 128); weight streams at 1 B/elem.
        w_bf = w_ref[...].astype(jnp.bfloat16)

        if split_f32:
            # f32 activations: hi/lo bf16 split -> two exact-product MXU passes
            # with f32 accumulation.  Reproduces full-f32 F.linear numerics.
            x = x_ref[...]
            x_hi = x.astype(jnp.bfloat16)
            x_lo = (x - x_hi.astype(jnp.float32)).astype(jnp.bfloat16)
            acc_ref[...] += (
                jnp.dot(x_hi, w_bf, preferred_element_type=jnp.float32)
                + jnp.dot(x_lo, w_bf, preferred_element_type=jnp.float32))
        else:
            acc_ref[...] += jnp.dot(x_ref[...], w_bf,
                                    preferred_element_type=jnp.float32)

        @pl.when(k == pl.num_programs(2) - 1)
        def _():
            out = acc_ref[...] * s_ref[...]
            if has_bias:
                out = out + b_ref[...]
            o_ref[...] = out.astype(o_ref.dtype)

    if has_bias:
        def kernel(x_ref, w_ref, s_ref, b_ref, o_ref, acc_ref):
            compute(x_ref, w_ref, s_ref, b_ref, o_ref, acc_ref)
    else:
        def kernel(x_ref, w_ref, s_ref, o_ref, acc_ref):
            compute(x_ref, w_ref, s_ref, None, o_ref, acc_ref)
    return kernel


def prepare_w8a16_params(quantized_weights, scales, bias=None, *,
                         tn=512, tk=1024):
    """One-time (per-layer) prep, hoisted out of the per-call path:
    weight pre-transposed to (K, N) int8 and padded, scales/bias cast+padded."""
    out_features, in_features = quantized_weights.shape
    tn_e = min(tn, _round_up(out_features, 128))
    tk_e = min(tk, _round_up(in_features, 128))

    w_kn = _pad_axis(_pad_axis(quantized_weights.T, 0, tk_e), 1, tn_e)
    scales2d = _pad_axis(
        scales.reshape(1, out_features).astype(jnp.float32), 1, tn_e)
    bias2d = None
    if bias is not None:
        bias2d = _pad_axis(
            bias.reshape(1, out_features).astype(jnp.float32), 1, tn_e)

    return dict(w_kn=jnp.asarray(w_kn, jnp.int8), scales2d=scales2d,
                bias2d=bias2d, out_features=out_features,
                in_features=in_features, tn_e=tn_e, tk_e=tk_e)


@functools.partial(jax.jit,
                   static_argnames=("out_features", "tm_e", "tn_blk", "tk_e"))
def _w8a16_apply_2d(x2d, w_kn, scales2d, bias2d, *, out_features, tm_e,
                    tn_blk, tk_e):
    M, _ = x2d.shape
    Kp, Np = w_kn.shape
    out_dtype = x2d.dtype
    has_bias = bias2d is not None
    split_f32 = jnp.dtype(out_dtype) != jnp.dtype(jnp.bfloat16)

    x_in = x2d if not split_f32 else x2d.astype(jnp.float32)
    # Pad K up to the prepared weight K, M up to the (balanced) tile multiple.
    x_in = _pad_axis(_pad_axis(x_in, 1, Kp), 0, tm_e)
    Mp = x_in.shape[0]

    grid = (Mp // tm_e, Np // tn_blk, Kp // tk_e)

    in_specs = [
        pl.BlockSpec((tm_e, tk_e), lambda i, j, k: (i, k)),     # x tile
        pl.BlockSpec((tk_e, tn_blk), lambda i, j, k: (k, j)),   # int8 W tile
        pl.BlockSpec((1, tn_blk), lambda i, j, k: (0, j)),      # scales row
    ]
    operands = [x_in, w_kn, scales2d]
    if has_bias:
        in_specs.append(pl.BlockSpec((1, tn_blk), lambda i, j, k: (0, j)))
        operands.append(bias2d)

    # VMEM budget: 2x double-buffered x / W / out tiles + f32 accumulator,
    # capped at 48 MiB so it fits v7x (64 MiB) as well as v5e/v6e (128 MiB).
    x_bytes = 4 if split_f32 else 2
    out_bytes = jnp.dtype(out_dtype).itemsize
    vmem_est = (2 * tm_e * tk_e * x_bytes + 2 * tk_e * tn_blk
                + 2 * tm_e * tn_blk * out_bytes + tm_e * tn_blk * 4
                + 4 * Np * 4 + (2 << 20))
    vmem_limit = int(min(max(vmem_est, 32 << 20), 48 << 20))

    out = pl.pallas_call(
        _make_kernel(has_bias, split_f32),
        out_shape=jax.ShapeDtypeStruct((Mp, Np), out_dtype),
        grid_spec=pltpu.PrefetchScalarGridSpec(
            num_scalar_prefetch=0,
            grid=grid,
            in_specs=in_specs,
            out_specs=pl.BlockSpec((tm_e, tn_blk), lambda i, j, k: (i, j)),
            scratch_shapes=[pltpu.VMEM((tm_e, tn_blk), jnp.float32)],
        ),
        compiler_params=pltpu.CompilerParams(
            dimension_semantics=("parallel", "parallel", "arbitrary"),
            vmem_limit_bytes=vmem_limit,
        ),
    )(*operands)

    return out[:M, :out_features]


def w8a16_apply(params, x, *, tm=512):
    """Forward with pre-prepared params (steady-state path; no weight prep)."""
    out_features = params["out_features"]
    in_features = params["in_features"]
    if x.shape[-1] != in_features:
        raise ValueError(f"expected last dim {in_features}, got {x.shape[-1]}")

    lead = x.shape[:-1]
    x2d = x.reshape(-1, in_features)
    M = max(int(x2d.shape[0]), 1)

    # Balanced, 16-aligned M tiling (avoids gross zero padding on ragged M;
    # 16 rows = full bf16 vreg sublanes).
    if M <= tm:
        tm_e = _round_up(M, 16)
    else:
        n_m = -(-M // tm)
        tm_e = _round_up(-(-M // n_m), 16)
    n_m_blocks = _round_up(M, tm_e) // tm_e

    # Keep >= 2 parallel output blocks when possible so dual-TC chips (v7x)
    # get work on both cores even for single-M-tile (decode) shapes.
    tn_e = params["tn_e"]
    Np = params["w_kn"].shape[1]
    tn_blk = tn_e
    if n_m_blocks == 1 and Np // tn_e == 1 and tn_e % 256 == 0:
        tn_blk = tn_e // 2

    out2d = _w8a16_apply_2d(x2d, params["w_kn"], params["scales2d"],
                            params["bias2d"], out_features=out_features,
                            tm_e=tm_e, tn_blk=tn_blk, tk_e=params["tk_e"])
    return out2d.reshape(*lead, out_features)


def w8_a16_forward(quantized_weights, x, scales, bias=None, *,
                   tm=512, tn=512, tk=1024):
    """Functional forward matching the PyTorch helper.  NOTE: re-prepares the
    weight layout on every call; prefer W8A16LinearLayer (prep hoisted to init)
    for repeated use."""
    params = prepare_w8a16_params(quantized_weights, scales, bias, tn=tn, tk=tk)
    return w8a16_apply(params, x, tm=tm)


class W8A16LinearLayer:
    """JAX/Pallas port of the PyTorch module (deterministic synthetic init)."""

    def __init__(self, in_features, out_features, bias=True, key=None,
                 dtype=jnp.float32, tm=512, tn=512, tk=1024):
        if key is None:
            key = jax.random.PRNGKey(0)
        kw, ks, kb = jax.random.split(key, 3)
        int_max = 127  # int8
        # torch.randint(low, high) is high-exclusive -> values in [-128, 126].
        self.quantized_weights = jax.random.randint(
            kw, (out_features, in_features), -int_max - 1, int_max,
            dtype=jnp.int32).astype(jnp.int8)
        self.scales = jax.random.normal(ks, (out_features,), dtype=dtype)
        self.bias = (jax.random.normal(kb, (1, out_features), dtype=dtype)
                     if bias else None)
        self._tm, self._tn, self._tk = tm, tn, tk
        self._refresh_params()

    def _refresh_params(self):
        # One-time weight transpose/pad + scales/bias prep (hoisted out of the
        # per-call path per the performance review).
        self._params = prepare_w8a16_params(
            self.quantized_weights, self.scales, self.bias,
            tn=self._tn, tk=self._tk)

    def quantize(self, weights):
        """Symmetric per-row int8 quantization (plain JAX, host-side utility)."""
        w_fp32 = jnp.asarray(weights, jnp.float32)
        scales = jnp.max(jnp.abs(w_fp32), axis=-1) / 127.0
        self.quantized_weights = jnp.round(w_fp32 / scales[:, None]).astype(jnp.int8)
        self.scales = scales.astype(jnp.asarray(weights).dtype)
        self.bias = None
        self._refresh_params()

    def __call__(self, x):
        return w8a16_apply(self._params, x, tm=self._tm)


if __name__ == "__main__":
    key = jax.random.PRNGKey(0)
    k_layer, k_x = jax.random.split(key)

    batch, seq, in_features, out_features = 2, 8, 32, 64
    layer = W8A16LinearLayer(in_features, out_features, bias=True, key=k_layer)

    x = jax.random.normal(k_x, (batch, seq, in_features), dtype=jnp.float32)

    out = jax.block_until_ready(layer(x))
    assert out.shape == (batch, seq, out_features)
    assert out.dtype == x.dtype

    # Reference: PyTorch semantics at full f32 (weight cast to input dtype).
    w_f32 = layer.quantized_weights.astype(jnp.float32)
    ref = jnp.dot(x.reshape(-1, in_features), w_f32.T,
                  precision=jax.lax.Precision.HIGHEST)
    ref = ref * layer.scales.reshape(1, -1) + layer.bias
    ref = ref.reshape(batch, seq, out_features)
    assert jnp.allclose(out, ref, atol=1.0, rtol=2e-3), \
        float(jnp.max(jnp.abs(out - ref)))

    # bias=None functional path (per-call prep variant).
    out_nb = jax.block_until_ready(
        w8_a16_forward(layer.quantized_weights, x, layer.scales, None))
    assert jnp.allclose(out_nb + layer.bias, out, atol=1e-3, rtol=1e-5)

    # bf16 activation path (single-pass MXU kernel).
    x_bf = x.astype(jnp.bfloat16)
    out_bf = jax.block_until_ready(layer(x_bf))
    assert out_bf.dtype == jnp.bfloat16
    ref_bf = (jnp.dot(x_bf.astype(jnp.float32).reshape(-1, in_features),
                      w_f32.T, precision=jax.lax.Precision.HIGHEST)
              * layer.scales.reshape(1, -1) + layer.bias)
    ref_bf = ref_bf.reshape(batch, seq, out_features)
    assert jnp.allclose(out_bf.astype(jnp.float32), ref_bf, atol=2.0, rtol=2e-2)

    # Larger ragged case exercising multi-step K accumulation + multi-N grid.
    in2, out2 = 384, 256
    layer2 = W8A16LinearLayer(in2, out2, bias=True, key=jax.random.PRNGKey(7),
                              tn=128, tk=128)
    x2 = jax.random.normal(jax.random.PRNGKey(11), (5, 7, in2),
                           dtype=jnp.float32)
    o2 = jax.block_until_ready(layer2(x2))
    ref2 = (jnp.dot(x2.reshape(-1, in2),
                    layer2.quantized_weights.astype(jnp.float32).T,
                    precision=jax.lax.Precision.HIGHEST)
            * layer2.scales.reshape(1, -1) + layer2.bias).reshape(5, 7, out2)
    assert jnp.allclose(o2, ref2, atol=2.0, rtol=2e-3), \
        float(jnp.max(jnp.abs(o2 - ref2)))

    print("KERNEL_OK")
</pallas_src>

<mosaic_0001>
module attributes {stable_mosaic.version = 11 : i64} {
  func.func @kernel(%arg0: i32, %arg1: i32, %arg2: i32, %arg3: memref<16x128xf32, #tpu.memory_space<vmem>>, %arg4: memref<128x128xi8, #tpu.memory_space<vmem>>, %arg5: memref<1x128xf32, #tpu.memory_space<vmem>>, %arg6: memref<1x128xf32, #tpu.memory_space<vmem>>, %arg7: memref<16x128xf32, #tpu.memory_space<vmem>>, %arg8: memref<16x128xf32, #tpu.memory_space<vmem>>) attributes {dimension_semantics = [#tpu.dimension_semantics<parallel>, #tpu.dimension_semantics<parallel>, #tpu.dimension_semantics<arbitrary>], iteration_bounds = array<i64: 1, 1, 1>, scalar_prefetch = 0 : i64, scratch_operands = 1 : i64, tpu.core_type = #tpu.core_type<tc>, window_params = [{transform_indices = @transform_0, window_bounds = array<i64: 16, 128>}, {transform_indices = @transform_1, window_bounds = array<i64: 128, 128>}, {transform_indices = @transform_2, window_bounds = array<i64: 1, 128>}, {transform_indices = @transform_3, window_bounds = array<i64: 1, 128>}, {transform_indices = @transform_4, window_bounds = array<i64: 16, 128>}]} {
    %c0_i32 = arith.constant 0 : i32
    %0 = arith.cmpi eq, %arg2, %c0_i32 : i32
    %1 = arith.extui %0 : i1 to i32
    %c0_i32_0 = arith.constant 0 : i32
    %2 = arith.cmpi ne, %1, %c0_i32_0 : i32
    scf.if %2 {
      %cst_11 = arith.constant 0.000000e+00 : f32
      %19 = vector.broadcast %cst_11 : f32 to vector<16x128xf32>
      %c0_12 = arith.constant 0 : index
      %c0_13 = arith.constant 0 : index
      %20 = vector.load %arg8[%c0_12, %c0_13] : memref<16x128xf32, #tpu.memory_space<vmem>>, vector<16x128xf32>
      tpu.vector_store %arg8[%c0_12, %c0_13], %19 {strides = array<i32>} : memref<16x128xf32, #tpu.memory_space<vmem>>, vector<16x128xf32>,
    } else {
    }
    %c0 = arith.constant 0 : index
    %c0_1 = arith.constant 0 : index
    %3 = vector.load %arg4[%c0, %c0_1] : memref<128x128xi8, #tpu.memory_space<vmem>>, vector<128x128xi8>
    %4 = arith.sitofp %3 : vector<128x128xi8> to vector<128x128xbf16>
    %c0_2 = arith.constant 0 : index
    %c0_3 = arith.constant 0 : index
    %5 = vector.load %arg3[%c0_2, %c0_3] : memref<16x128xf32, #tpu.memory_space<vmem>>, vector<16x128xf32>
    %6 = arith.truncf %5 : vector<16x128xf32> to vector<16x128xbf16>
    %7 = arith.extf %6 : vector<16x128xbf16> to vector<16x128xf32>
    %8 = arith.subf %5, %7 : vector<16x128xf32>
    %9 = arith.truncf %8 : vector<16x128xf32> to vector<16x128xbf16>
    %c0_4 = arith.constant 0 : index
    %c0_5 = arith.constant 0 : index
    %10 = vector.load %arg8[%c0_4, %c0_5] : memref<16x128xf32, #tpu.memory_space<vmem>>, vector<16x128xf32>
    %cst = arith.constant dense<0.000000e+00> : vector<16x128xf32>
    %11 = tpu.matmul %6, %4, %cst {dimension_numbers = #tpu.dot_dimension_numbers<[1], [0], [0], [1], [0, 0, 1, 1], [], []>} : vector<16x128xbf16>, vector<128x128xbf16>, vector<16x128xf32> -> vector<16x128xf32>
    %cst_6 = arith.constant dense<0.000000e+00> : vector<16x128xf32>
    %12 = tpu.matmul %9, %4, %cst_6 {dimension_numbers = #tpu.dot_dimension_numbers<[1], [0], [0], [1], [0, 0, 1, 1], [], []>} : vector<16x128xbf16>, vector<128x128xbf16>, vector<16x128xf32> -> vector<16x128xf32>
    %13 = arith.addf %11, %12 : vector<16x128xf32>
    %14 = arith.addf %10, %13 : vector<16x128xf32>
    %c0_7 = arith.constant 0 : index
    %c0_8 = arith.constant 0 : index
    %15 = vector.load %arg8[%c0_7, %c0_8] : memref<16x128xf32, #tpu.memory_space<vmem>>, vector<16x128xf32>
    tpu.vector_store %arg8[%c0_7, %c0_8], %14 {strides = array<i32>} : memref<16x128xf32, #tpu.memory_space<vmem>>, vector<16x128xf32>,
    %c0_i32_9 = arith.constant 0 : i32
    %16 = arith.cmpi eq, %arg2, %c0_i32_9 : i32
    %17 = arith.extui %16 : i1 to i32
    %c0_i32_10 = arith.constant 0 : i32
    %18 = arith.cmpi ne, %17, %c0_i32_10 : i32
    scf.if %18 {
      %c0_11 = arith.constant 0 : index
      %c0_12 = arith.constant 0 : index
      %19 = vector.load %arg8[%c0_11, %c0_12] : memref<16x128xf32, #tpu.memory_space<vmem>>, vector<16x128xf32>
      %c0_13 = arith.constant 0 : index
      %c0_14 = arith.constant 0 : index
      %20 = vector.load %arg5[%c0_13, %c0_14] : memref<1x128xf32, #tpu.memory_space<vmem>>, vector<1x128xf32>
      %21 = vector.broadcast %20 : vector<1x128xf32> to vector<16x128xf32>
      %22 = arith.mulf %19, %21 : vector<16x128xf32>
      %c0_15 = arith.constant 0 : index
      %c0_16 = arith.constant 0 : index
      %23 = vector.load %arg6[%c0_15, %c0_16] : memref<1x128xf32, #tpu.memory_space<vmem>>, vector<1x128xf32>
      %24 = vector.broadcast %23 : vector<1x128xf32> to vector<16x128xf32>
      %25 = arith.addf %22, %24 : vector<16x128xf32>
      %c0_17 = arith.constant 0 : index
      %c0_18 = arith.constant 0 : index
      %26 = vector.load %arg7[%c0_17, %c0_18] : memref<16x128xf32, #tpu.memory_space<vmem>>, vector<16x128xf32>
      tpu.vector_store %arg7[%c0_17, %c0_18], %25 {strides = array<i32>} : memref<16x128xf32, #tpu.memory_space<vmem>>, vector<16x128xf32>,
    } else {
    }
    return
  }
  func.func @transform_0(%arg0: i32, %arg1: i32, %arg2: i32) -> (i32, i32) {
    %c0_i32 = arith.constant 0 : i32
    return %arg0, %arg2 : i32, i32
  }
  func.func @transform_1(%arg0: i32, %arg1: i32, %arg2: i32) -> (i32, i32) {
    %c0_i32 = arith.constant 0 : i32
    return %arg2, %arg1 : i32, i32
  }
  func.func @transform_2(%arg0: i32, %arg1: i32, %arg2: i32) -> (i32, i32) {
    %c0_i32 = arith.constant 0 : i32
    %c0_i32_0 = arith.constant 0 : i32
    return %c0_i32, %arg1 : i32, i32
  }
  func.func @transform_3(%arg0: i32, %arg1: i32, %arg2: i32) -> (i32, i32) {
    %c0_i32 = arith.constant 0 : i32
    %c0_i32_0 = arith.constant 0 : i32
    return %c0_i32, %arg1 : i32, i32
  }
  func.func @transform_4(%arg0: i32, %arg1: i32, %arg2: i32) -> (i32, i32) {
    %c0_i32 = arith.constant 0 : i32
    return %arg0, %arg1 : i32, i32
  }
}

</mosaic_0001>

<llo_original>
// kernel: _w8a16_apply_2d.1
$region0: #{_w8a16_apply_2d.1}
  #allocation0 [shape = 'u32[]', space=smem, size = 0x4, offset = 0x4, fixed_abs, tag = 'smem constant byte address 0x4 - core index']
  #allocation1 [shape = 'u32[144,128]{1,0:T(1,128)}', space=vmem, size = 0x12000, scoped, tag = 'internal scratch']
  #allocation2 [shape = 'f32[16,128]{1,0:T(8,128)}', space=vmem, size = 0x2000, scoped, tag = 'scratch operand']
  %s0 = inlined_call_operand.vmem [shape: f32[16,128], index: 0, kind: input, shape index: {}]
  %s1 = inlined_call_operand.vmem [shape: s8[128,128], index: 1, kind: input, shape index: {}]
  %s2 = inlined_call_operand.vmem [shape: f32[1,128], index: 2, kind: input, shape index: {}]
  %s3 = inlined_call_operand.vmem [shape: f32[1,128], index: 3, kind: input, shape index: {}]
  %s4 = inlined_call_operand.hbm [shape: f32[16,128], index: 4, kind: output, shape index: {}]
  %s5 = sld [smem:[#allocation0]]
  $region34: #{_w8a16_apply_2d.1} parent=0
    _
  %s7 = ssub.s32 1, %s5
  %s8 = scalar_select 0, %s7, %s5
  $region1: #{_w8a16_apply_2d.1} parent=0
    #allocation3 [shape = 'u8[8192]{0}', space=vmem, size = 0x2000, scoped, tag = 'output window, operand 0, single buffered']
    #allocation4 [shape = 's32[1]{0}', space=sflag, size = 0x4, scoped, tag = 'scoped memory for _w8a16_apply_2d.1']
    %9 = vsyncpa [#allocation4], 0
    // Predicated region
    $region2: #{_w8a16_apply_2d.1} parent=1 // pred_check
      _
    $region3: #{_w8a16_apply_2d.1} parent=1 // pred_check_branch
      %11 = sbr.rel (0) target = $region5
    $region4: #{_w8a16_apply_2d.1} parent=1 // pred_region
      _
    $region5: #{_w8a16_apply_2d.1} parent=1 // pred_fallthru
      _
    // Predicated region
    $region6: #{_w8a16_apply_2d.1} parent=1 // pred_check
      _
    $region7: #{_w8a16_apply_2d.1} parent=1 // pred_check_branch
      %13 = sbr.rel (0) target = $region9
    $region8: #{_w8a16_apply_2d.1} parent=1 // pred_region
      _
    $region9: #{_w8a16_apply_2d.1} parent=1 // pred_fallthru
      _
    // Predicated region
    $region10: #{_w8a16_apply_2d.1} parent=1 // pred_check
      _
    $region11: #{_w8a16_apply_2d.1} parent=1 // pred_check_branch
      %15 = sbr.rel (0) target = $region13
    $region12: #{_w8a16_apply_2d.1} parent=1 // pred_region
      _
    $region13: #{_w8a16_apply_2d.1} parent=1 // pred_fallthru
      _
    // Predicated region
    $region14: #{_w8a16_apply_2d.1} parent=1 // pred_check
      _
    $region15: #{_w8a16_apply_2d.1} parent=1 // pred_check_branch
      %17 = sbr.rel (0) target = $region17
    $region16: #{_w8a16_apply_2d.1} parent=1 // pred_region
      _
    $region17: #{_w8a16_apply_2d.1} parent=1 // pred_fallthru
      _
    %p19 = scmp.eq.s32.totalorder 0, 0
    // Predicated region
    $region18: #{_w8a16_apply_2d.1} parent=1 // pred_check
      %p20 = pneg %p19
    $region19: #{_w8a16_apply_2d.1} parent=1 // pred_check_branch
      %22 = sbr.rel (%p20) target = $region21
    $region20: #{_w8a16_apply_2d.1} parent=1 // pred_region
      %23 = vst [vmem:[#allocation2] sm:$0xff] 0.0
      %24 = vst [vmem:[#allocation2 + $0x8] sm:$0xff] 0.0
    $region21: #{_w8a16_apply_2d.1} parent=1 // pred_fallthru
      _
    %v25 = vld [vmem:[%s1] sm:$0xff]
    %v26 = vld [vmem:[%s1 + $0x8] sm:$0xff]
    %v27 = vld [vmem:[%s1 + $0x10] sm:$0xff]
    %v28 = vld [vmem:[%s1 + $0x18] sm:$0xff]
    %v29 = vunpack.c.l.s8.bf16 %v25
    %v30 = vunpack.c.h.s8.bf16 %v25
    %v31 = vunpack.c.l.s8.bf16 %v26
    %v32 = vunpack.c.h.s8.bf16 %v26
    %v33 = vunpack.c.l.s8.bf16 %v27
    %v34 = vunpack.c.h.s8.bf16 %v27
    %v35 = vunpack.c.l.s8.bf16 %v28
    %v36 = vunpack.c.h.s8.bf16 %v28
    %v37 = vld [vmem:[%s0] sm:$0xff]
    %v38 = vld [vmem:[%s0 + $0x8] sm:$0xff]
    %v39 = vpack.c.bf16 %v38, %v37
    %v40 = vunpack.c.l.bf16 %v39
    %v41 = vunpack.c.h.bf16 %v39
    %v42 = vsub.f32 %v37, %v40
    %v43 = vsub.f32 %v38, %v41
    %v44 = vpack.c.bf16 %v43, %v42
    %v45 = vld [vmem:[#allocation2] sm:$0xff]
    %v46 = vld [vmem:[#allocation2 + $0x8] sm:$0xff]
    %47 = vmatprep.subr.bf16.mxu0 0
    %48 = vmatpush1.bf16.msra.mxu0 %v29
    %49 = vmatprep.subr.bf16.mxu0 0
    %50 = vmatpush1.bf16.msra.mxu0 %v30
    %51 = vmatprep.subr.bf16.mxu0 0
    %52 = vmatpush1.bf16.msra.mxu0 %v31
    %53 = vmatprep.subr.bf16.mxu0 0
    %54 = vmatpush1.bf16.msra.mxu0 %v32
    %55 = vmatprep.subr.bf16.mxu0 0
    %56 = vmatpush1.bf16.msra.mxu0 %v33
    %57 = vmatprep.subr.bf16.mxu0 0
    %58 = vmatpush1.bf16.msra.mxu0 %v34
    %59 = vmatprep.subr.bf16.mxu0 0
    %60 = vmatpush1.bf16.msra.mxu0 %v35
    %61 = vmatprep.subr.bf16.mxu0 0
    %62 = vmatpush1.bf16.msra.mxu0 %v36
    %63 = vmatprep.subr.bf16.mxu0 0
    %64 = vmatpush1.bf16.msra.mxu0 0
    %65 = vmatprep.subr.bf16.mxu0 0
    %66 = vmatpush1.bf16.msra.mxu0 0
    %67 = vmatprep.subr.bf16.mxu0 0
    %68 = vmatpush1.bf16.msra.mxu0 0
    %69 = vmatprep.subr.bf16.mxu0 0
    %70 = vmatpush1.bf16.msra.mxu0 0
    %71 = vmatprep.subr.bf16.mxu0 0
    %72 = vmatpush1.bf16.msra.mxu0 0
    %73 = vmatprep.subr.bf16.mxu0 0
    %74 = vmatpush1.bf16.msra.mxu0 0
    %75 = vmatprep.subr.bf16.mxu0 0
    %76 = vmatpush1.bf16.msra.mxu0 0
    %77 = vmatprep.subr.bf16.mxu0 0
    %78 = vmatpush1.bf16.msra.mxu0 0
    %79 = vmatprep.mubr.bf16.mxu0 0
    %80 = vmatmul.mubr.bf16.gmra.mrb[0].mxu0 %v44
    %v81 = vpop.f32.mrb[0].mxu0
    %v82 = vadd.f32 0.0, %v81
    %v83 = vpop.f32.mrb[0].mxu0
    %v84 = vpop.f32.mrb[0].mxu0
    %v85 = vadd.f32 0.0, %v84
    %v86 = vpop.f32.mrb[0].mxu0
    %87 = vdwg.mxu0
    %88 = vmatprep.subr.bf16.mxu0 0
    %89 = vmatpush1.bf16.msra.mxu0 %v29
    %90 = vmatprep.subr.bf16.mxu0 0
    %91 = vmatpush1.bf16.msra.mxu0 %v30
    %92 = vmatprep.subr.bf16.mxu0 0
    %93 = vmatpush1.bf16.msra.mxu0 %v31
    %94 = vmatprep.subr.bf16.mxu0 0
    %95 = vmatpush1.bf16.msra.mxu0 %v32
    %96 = vmatprep.subr.bf16.mxu0 0
    %97 = vmatpush1.bf16.msra.mxu0 %v33
    %98 = vmatprep.subr.bf16.mxu0 0
    %99 = vmatpush1.bf16.msra.mxu0 %v34
    %100 = vmatprep.subr.bf16.mxu0 0
    %101 = vmatpush1.bf16.msra.mxu0 %v35
    %102 = vmatprep.subr.bf16.mxu0 0
    %103 = vmatpush1.bf16.msra.mxu0 %v36
    %104 = vmatprep.subr.bf16.mxu0 0
    %105 = vmatpush1.bf16.msra.mxu0 0
    %106 = vmatprep.subr.bf16.mxu0 0
    %107 = vmatpush1.bf16.msra.mxu0 0
    %108 = vmatprep.subr.bf16.mxu0 0
    %109 = vmatpush1.bf16.msra.mxu0 0
    %110 = vmatprep.subr.bf16.mxu0 0
    %111 = vmatpush1.bf16.msra.mxu0 0
    %112 = vmatprep.subr.bf16.mxu0 0
    %113 = vmatpush1.bf16.msra.mxu0 0
    %114 = vmatprep.subr.bf16.mxu0 0
    %115 = vmatpush1.bf16.msra.mxu0 0
    %116 = vmatprep.subr.bf16.mxu0 0
    %117 = vmatpush1.bf16.msra.mxu0 0
    %118 = vmatprep.subr.bf16.mxu0 0
    %119 = vmatpush1.bf16.msra.mxu0 0
    %120 = vmatprep.mubr.bf16.mxu0 0
    %121 = vmatmul.mubr.bf16.gmra.mrb[0].mxu0 %v39
    %v122 = vpop.f32.mrb[0].mxu0
    %v123 = vadd.f32 %v82, %v122
    %v124 = vpop.f32.mrb[0].mxu0
    %v125 = vpop.f32.mrb[0].mxu0
    %v126 = vadd.f32 %v85, %v125
    %v127 = vpop.f32.mrb[0].mxu0
    %128 = vdwg.mxu0
    %v129 = vadd.f32 %v45, %v123
    %v130 = vadd.f32 %v46, %v126
    %131 = vst [vmem:[#allocation2] sm:$0xff] %v129
    %132 = vst [vmem:[#allocation2 + $0x8] sm:$0xff] %v130
    // Predicated region
    $region22: #{_w8a16_apply_2d.1} parent=1 // pred_check
      %p133 = pneg %p19
    $region23: #{_w8a16_apply_2d.1} parent=1 // pred_check_branch
      %135 = sbr.rel (%p133) target = $region25
    $region24: #{_w8a16_apply_2d.1} parent=1 // pred_region
      %v136 = vld [vmem:[#allocation2] sm:$0xff]
      %v137 = vld [vmem:[#allocation2 + $0x8] sm:$0xff]
      %v138 = vld [vmem:[%s2] sm:$0x1]
      %v140 = vlaneseq
      %v141 = vshrl.u32 %v140, 7
      %v142 = vsub.s32 0, %v141
      %v143 = vrot.slane %v138, %v142
      %v145 = vmul.f32 %v136, %v143
      %v146 = vmul.f32 %v137, %v143
      %v147 = vld [vmem:[%s3] sm:$0x1]
      %v149 = vlaneseq
      %v150 = vshrl.u32 %v149, 7
      %v151 = vsub.s32 0, %v150
      %v152 = vrot.slane %v147, %v151
      %v154 = vadd.f32 %v145, %v152
      %v155 = vadd.f32 %v146, %v152
      %156 = vst [vmem:[#allocation3] sm:$0xff] %v154
      %157 = vst [vmem:[#allocation3 + $0x8] sm:$0xff] %v155
    $region25: #{_w8a16_apply_2d.1} parent=1 // pred_fallthru
      _
    // Predicated region
    $region26: #{_w8a16_apply_2d.1} parent=1 // pred_check
      _
    $region27: #{_w8a16_apply_2d.1} parent=1 // pred_check_branch
      %159 = sbr.rel (0) target = $region29
    $region28: #{_w8a16_apply_2d.1} parent=1 // pred_region
      %s161 = ssub.s32 256, 256
      %162 = vsyncadd [#allocation4], %s161
      %s163 = sshll.u32 [#allocation3], 4
      %s164 = int_to_ptr.vmem [resolvable:$true] %s163
      %169 = dma.vmem_to_hbm [thread:$0]  %s164, 256, %s4, [#allocation4], 128, 128, 8
    $region29: #{_w8a16_apply_2d.1} parent=1 // pred_fallthru
      _
    // Predicated region
    $region30: #{_w8a16_apply_2d.1} parent=1 // pred_check
      _
    $region31: #{_w8a16_apply_2d.1} parent=1 // pred_check_branch
      %171 = sbr.rel (0) target = $region33
    $region32: #{_w8a16_apply_2d.1} parent=1 // pred_region
      %172 = dma.done [#allocation4], 256
    $region33: #{_w8a16_apply_2d.1} parent=1 // pred_fallthru
      _
    %173 = vsyncpa [#allocation4], 1

</llo_original>
